<compile_context>
chip_gen: v7x
topology: tpu7x:2x2x1
jax: 0.10.0
libtpu: 0.0.40
codegen_flags: <defaults>
</compile_context>

<pallas_src>
import jax
import jax.numpy as jnp
from jax.experimental import pallas as pl
from jax.experimental.pallas import tpu as pltpu

EPS = 1e-5   # torch.nn.LayerNorm default
LANE = 128


def prenorm_kernel(x_ref, gamma_ref, beta_ref, w_ref, bias_ref, o_ref,
                   normed_ref):
    # x_ref:     (tile, dim)      gamma/beta: (1, dim) f32
    # w_ref:     (dim, tn)        bias_ref:   (1, tn) f32
    # o_ref:     (tile, tn)       normed_ref: (tile, dim) scratch (matmul dtype)
    j = pl.program_id(1)

    # Compute LayerNorm (stats + affine) once per row tile, on the first
    # column tile; the scratch persists across the (sequential) j axis.
    @pl.when(j == 0)
    def _():
        x = x_ref[...].astype(jnp.float32)
        mean = jnp.mean(x, axis=-1, keepdims=True)
        xc = x - mean
        var = jnp.mean(xc * xc, axis=-1, keepdims=True)     # biased, like torch
        inv = jax.lax.rsqrt(var + EPS)
        normed = xc * (inv * gamma_ref[...]) + beta_ref[...]
        normed_ref[...] = normed.astype(normed_ref.dtype)

    y = jnp.dot(normed_ref[...], w_ref[...],
                preferred_element_type=jnp.float32)
    y = y + bias_ref[...]
    o_ref[...] = y.astype(o_ref.dtype)


def _round_up(x, m):
    return (x + m - 1) // m * m


def prenorm_linear(x, gamma, beta, w, bias, *, tile_rows=512,
                   matmul_dtype=None):
    """fn(LayerNorm(x)) with fn = Linear(dim, out_dim), x: [..., dim]."""
    orig_shape = x.shape
    dim = orig_shape[-1]
    out_dim = w.shape[-1]

    mm_dtype = jnp.dtype(matmul_dtype) if matmul_dtype is not None \
        else jnp.dtype(w.dtype)
    mm_bytes = mm_dtype.itemsize
    x_bytes = jnp.dtype(x.dtype).itemsize
    out_bytes = x_bytes

    # ---- chip-aware VMEM budget (v7x: 64 MiB physical; v5e/v6e: 128 MiB) ----
    try:
        vmem_cap = int(pltpu.get_tpu_info().vmem_capacity_bytes)
    except Exception:
        vmem_cap = 64 * 1024 * 1024          # conservative (v7x)
    vmem_budget = min(vmem_cap * 3 // 4, 100 * 1024 * 1024)

    # ---- column (out_dim) tiling: lane-dense, W slab bounded by VMEM ----
    out_lane = _round_up(out_dim, LANE)
    w_slab_budget = vmem_budget // 3
    if dim * out_lane * mm_bytes <= w_slab_budget:
        tn = out_lane                 # W fully resident -> single-buffer it
        w_buffers = 1
    else:
        tn = max(LANE, (min(1024, out_lane) // LANE) * LANE)
        while tn > LANE and 2 * dim * tn * mm_bytes > w_slab_budget:
            tn -= LANE
        w_buffers = 2                 # slab changes along j -> keep 2 buffers
    out_pad = _round_up(out_dim, tn)
    n_col_tiles = out_pad // tn

    # ---- row tiling (sublane-aligned, shrunk to fit the VMEM budget) ----
    x2 = x.reshape(-1, dim)
    n_rows = x2.shape[0]
    row_align = 16 if x.dtype == jnp.bfloat16 else 8
    tile = max(row_align, _round_up(tile_rows, row_align))
    tile = min(tile, _round_up(n_rows, row_align))

    def vmem_estimate(t):
        return (2 * t * dim * x_bytes               # x (double-buffered)
                + 2 * t * tn * out_bytes            # out (double-buffered)
                + t * dim * mm_bytes                # normed scratch
                + w_buffers * dim * tn * mm_bytes   # W slab
                + w_buffers * tn * 4                # bias slab
                + 2 * dim * 4                       # gamma / beta
                + 2 * t * dim * 4)                  # f32 LayerNorm temporaries

    while tile > row_align and vmem_estimate(tile) > vmem_budget:
        tile = max(row_align, _round_up(tile // 2, row_align))

    n_pad = _round_up(n_rows, tile)
    if n_pad != n_rows:
        # Zero rows are safe: var=0 -> rsqrt(eps) finite; padded rows are
        # sliced off below.
        x2 = jnp.pad(x2, ((0, n_pad - n_rows), (0, 0)))

    # ---- parameter prep (no per-call affine fold; affine applied in-kernel) ----
    w_p = w.astype(mm_dtype)
    bias_p = bias.astype(jnp.float32).reshape(1, out_dim)
    if out_pad != out_dim:
        w_p = jnp.pad(w_p, ((0, 0), (0, out_pad - out_dim)))
        bias_p = jnp.pad(bias_p, ((0, 0), (0, out_pad - out_dim)))
    gamma_p = gamma.astype(jnp.float32).reshape(1, dim)
    beta_p = beta.astype(jnp.float32).reshape(1, dim)

    grid = (n_pad // tile, n_col_tiles)
    out_shape = jax.ShapeDtypeStruct((n_pad, out_pad), x.dtype)
    out_spec = pl.BlockSpec((tile, tn), lambda i, j: (i, j))
    scratch = [pltpu.VMEM((tile, dim), mm_dtype)]
    args = (x2, gamma_p, beta_p, w_p, bias_p)

    def build_in_specs(use_single_buffer):
        def maybe(shape, imap, want_single):
            if use_single_buffer and want_single:
                return pl.BlockSpec(shape, imap, pipeline_mode=pl.Buffered(1))
            return pl.BlockSpec(shape, imap)
        return [
            pl.BlockSpec((tile, dim), lambda i, j: (i, 0)),          # x tile
            maybe((1, dim), lambda i, j: (0, 0), True),              # gamma
            maybe((1, dim), lambda i, j: (0, 0), True),              # beta
            maybe((dim, tn), lambda i, j: (0, j), w_buffers == 1),   # W slab
            maybe((1, tn), lambda i, j: (0, j), w_buffers == 1),     # bias
        ]

    def run(in_specs):
        return pl.pallas_call(
            prenorm_kernel,
            out_shape=out_shape,
            grid_spec=pltpu.PrefetchScalarGridSpec(
                num_scalar_prefetch=0,
                grid=grid,
                in_specs=in_specs,
                out_specs=out_spec,
                scratch_shapes=scratch,
            ),
            compiler_params=pltpu.CompilerParams(
                # j axis must stay "arbitrary": the normed scratch written at
                # j==0 is reused by later column tiles of the same row tile.
                dimension_semantics=("parallel", "arbitrary"),
                vmem_limit_bytes=vmem_budget,
            ),
        )(*args)

    try:
        out = run(build_in_specs(True))
    except Exception:
        # pipeline_mode=pl.Buffered(1) unsupported on this jax build: fall
        # back to default double buffering (identical results, more VMEM).
        out = run(build_in_specs(False))

    out = out[:n_rows, :out_dim]
    return out.reshape(*orig_shape[:-1], out_dim)


def prenorm_linear_ref(x, gamma, beta, w, bias):
    xf = x.astype(jnp.float32)
    mean = jnp.mean(xf, axis=-1, keepdims=True)
    var = jnp.mean((xf - mean) ** 2, axis=-1, keepdims=True)
    normed = (xf - mean) * jax.lax.rsqrt(var + EPS) * gamma.astype(jnp.float32) \
             + beta.astype(jnp.float32)
    return normed @ w.astype(jnp.float32) + bias.astype(jnp.float32)


if __name__ == "__main__":
    # Small but lane-dense shapes; odd seq exercises the row-padding path.
    batch, seq, dim, out_dim = 2, 7, 128, 128

    key = jax.random.PRNGKey(0)
    kx, kg, kb, kw, kbb, kw2, kb2 = jax.random.split(key, 7)

    x = jax.random.normal(kx, (batch, seq, dim), dtype=jnp.float32)
    gamma = 1.0 + 0.1 * jax.random.normal(kg, (dim,), dtype=jnp.float32)
    beta = 0.1 * jax.random.normal(kb, (dim,), dtype=jnp.float32)
    w = jax.random.normal(kw, (dim, out_dim), dtype=jnp.float32) / jnp.sqrt(dim)
    bias = 0.1 * jax.random.normal(kbb, (out_dim,), dtype=jnp.float32)

    ref = prenorm_linear_ref(x, gamma, beta, w, bias)

    # f32 path (tight tolerance).
    out = prenorm_linear(x, gamma, beta, w, bias)
    jax.block_until_ready(out)
    assert out.shape == (batch, seq, out_dim)
    assert jnp.allclose(out, ref, atol=1e-3, rtol=1e-3)

    # Non-multiple-of-128 out_dim exercises the lane-dense padding path.
    out_dim2 = 80
    w2 = jax.random.normal(kw2, (dim, out_dim2), dtype=jnp.float32) / jnp.sqrt(dim)
    bias2 = 0.1 * jax.random.normal(kb2, (out_dim2,), dtype=jnp.float32)
    ref2 = prenorm_linear_ref(x, gamma, beta, w2, bias2)
    out2 = prenorm_linear(x, gamma, beta, w2, bias2)
    jax.block_until_ready(out2)
    assert out2.shape == (batch, seq, out_dim2)
    assert jnp.allclose(out2, ref2, atol=1e-3, rtol=1e-3)

    # bf16 activations/weights path (native MXU dtype; looser tolerance).
    out_bf16 = prenorm_linear(x.astype(jnp.bfloat16), gamma, beta,
                              w.astype(jnp.bfloat16), bias.astype(jnp.bfloat16))
    jax.block_until_ready(out_bf16)
    assert out_bf16.shape == (batch, seq, out_dim)
    assert jnp.allclose(out_bf16.astype(jnp.float32), ref, atol=1e-1, rtol=1e-1)

    # f32 weights, bf16 MXU operands via the matmul_dtype knob (f32 accumulate).
    out_mm16 = prenorm_linear(x, gamma, beta, w, bias, matmul_dtype=jnp.bfloat16)
    jax.block_until_ready(out_mm16)
    assert jnp.allclose(out_mm16, ref, atol=5e-2, rtol=5e-2)

    # TODO(synk): PreNorm wraps an arbitrary `fn`; only fn=Linear is fused here.
    print("KERNEL_OK")
</pallas_src>

<mosaic_0001>
module attributes {stable_mosaic.version = 11 : i64} {
  func.func @prenorm_kernel(%arg0: i32, %arg1: i32, %arg2: memref<16x128xf32, #tpu.memory_space<vmem>>, %arg3: memref<1x128xf32, #tpu.memory_space<vmem>>, %arg4: memref<1x128xf32, #tpu.memory_space<vmem>>, %arg5: memref<128x128xf32, #tpu.memory_space<vmem>>, %arg6: memref<1x128xf32, #tpu.memory_space<vmem>>, %arg7: memref<16x128xf32, #tpu.memory_space<vmem>>, %arg8: memref<16x128xf32, #tpu.memory_space<vmem>>) attributes {dimension_semantics = [#tpu.dimension_semantics<parallel>, #tpu.dimension_semantics<arbitrary>], iteration_bounds = array<i64: 1, 1>, scalar_prefetch = 0 : i64, scratch_operands = 1 : i64, tpu.core_type = #tpu.core_type<tc>, window_params = [{transform_indices = @transform_0, window_bounds = array<i64: 16, 128>}, {pipeline_mode = #tpu.pipeline_mode<synchronous>, transform_indices = @transform_1, window_bounds = array<i64: 1, 128>}, {pipeline_mode = #tpu.pipeline_mode<synchronous>, transform_indices = @transform_2, window_bounds = array<i64: 1, 128>}, {pipeline_mode = #tpu.pipeline_mode<synchronous>, transform_indices = @transform_3, window_bounds = array<i64: 128, 128>}, {pipeline_mode = #tpu.pipeline_mode<synchronous>, transform_indices = @transform_4, window_bounds = array<i64: 1, 128>}, {transform_indices = @transform_5, window_bounds = array<i64: 16, 128>}]} {
    %c0_i32 = arith.constant 0 : i32
    %0 = arith.cmpi eq, %arg1, %c0_i32 : i32
    %1 = arith.extui %0 : i1 to i32
    %c0_i32_0 = arith.constant 0 : i32
    %2 = arith.cmpi ne, %1, %c0_i32_0 : i32
    scf.if %2 {
      %c0_8 = arith.constant 0 : index
      %c0_9 = arith.constant 0 : index
      %10 = vector.load %arg2[%c0_8, %c0_9] : memref<16x128xf32, #tpu.memory_space<vmem>>, vector<16x128xf32>
      %cst_10 = arith.constant dense<0.000000e+00> : vector<16xf32>
      %11 = vector.multi_reduction <add>, %10, %cst_10 [1] : vector<16x128xf32> to vector<16xf32>
      %12 = vector.shape_cast %11 : vector<16xf32> to vector<16x1xf32>
      %cst_11 = arith.constant 1.280000e+02 : f32
      %13 = vector.broadcast %cst_11 : f32 to vector<16x1xf32>
      %14 = arith.divf %12, %13 : vector<16x1xf32>
      %15 = vector.broadcast %14 : vector<16x1xf32> to vector<16x128xf32>
      %16 = arith.subf %10, %15 : vector<16x128xf32>
      %17 = arith.mulf %16, %16 : vector<16x128xf32>
      %cst_12 = arith.constant dense<0.000000e+00> : vector<16xf32>
      %18 = vector.multi_reduction <add>, %17, %cst_12 [1] : vector<16x128xf32> to vector<16xf32>
      %19 = vector.shape_cast %18 : vector<16xf32> to vector<16x1xf32>
      %cst_13 = arith.constant 1.280000e+02 : f32
      %20 = vector.broadcast %cst_13 : f32 to vector<16x1xf32>
      %21 = arith.divf %19, %20 : vector<16x1xf32>
      %cst_14 = arith.constant 9.99999974E-6 : f32
      %22 = vector.broadcast %cst_14 : f32 to vector<16x1xf32>
      %23 = arith.addf %21, %22 : vector<16x1xf32>
      %24 = math.rsqrt %23 : vector<16x1xf32>
      %c0_15 = arith.constant 0 : index
      %c0_16 = arith.constant 0 : index
      %25 = vector.load %arg3[%c0_15, %c0_16] : memref<1x128xf32, #tpu.memory_space<vmem>>, vector<1x128xf32>
      %26 = vector.broadcast %24 : vector<16x1xf32> to vector<16x128xf32>
      %27 = vector.broadcast %25 : vector<1x128xf32> to vector<16x128xf32>
      %28 = arith.mulf %26, %27 : vector<16x128xf32>
      %29 = arith.mulf %16, %28 : vector<16x128xf32>
      %c0_17 = arith.constant 0 : index
      %c0_18 = arith.constant 0 : index
      %30 = vector.load %arg4[%c0_17, %c0_18] : memref<1x128xf32, #tpu.memory_space<vmem>>, vector<1x128xf32>
      %31 = vector.broadcast %30 : vector<1x128xf32> to vector<16x128xf32>
      %32 = arith.addf %29, %31 : vector<16x128xf32>
      %c0_19 = arith.constant 0 : index
      %c0_20 = arith.constant 0 : index
      %33 = vector.load %arg8[%c0_19, %c0_20] : memref<16x128xf32, #tpu.memory_space<vmem>>, vector<16x128xf32>
      tpu.vector_store %arg8[%c0_19, %c0_20], %32 {strides = array<i32>} : memref<16x128xf32, #tpu.memory_space<vmem>>, vector<16x128xf32>,
    } else {
    }
    %c0 = arith.constant 0 : index
    %c0_1 = arith.constant 0 : index
    %3 = vector.load %arg8[%c0, %c0_1] : memref<16x128xf32, #tpu.memory_space<vmem>>, vector<16x128xf32>
    %c0_2 = arith.constant 0 : index
    %c0_3 = arith.constant 0 : index
    %4 = vector.load %arg5[%c0_2, %c0_3] : memref<128x128xf32, #tpu.memory_space<vmem>>, vector<128x128xf32>
    %cst = arith.constant dense<0.000000e+00> : vector<16x128xf32>
    %5 = tpu.matmul %3, %4, %cst {dimension_numbers = #tpu.dot_dimension_numbers<[1], [0], [0], [1], [0, 0, 1, 1], [], []>} : vector<16x128xf32>, vector<128x128xf32>, vector<16x128xf32> -> vector<16x128xf32>
    %c0_4 = arith.constant 0 : index
    %c0_5 = arith.constant 0 : index
    %6 = vector.load %arg6[%c0_4, %c0_5] : memref<1x128xf32, #tpu.memory_space<vmem>>, vector<1x128xf32>
    %7 = vector.broadcast %6 : vector<1x128xf32> to vector<16x128xf32>
    %8 = arith.addf %5, %7 : vector<16x128xf32>
    %c0_6 = arith.constant 0 : index
    %c0_7 = arith.constant 0 : index
    %9 = vector.load %arg7[%c0_6, %c0_7] : memref<16x128xf32, #tpu.memory_space<vmem>>, vector<16x128xf32>
    tpu.vector_store %arg7[%c0_6, %c0_7], %8 {strides = array<i32>} : memref<16x128xf32, #tpu.memory_space<vmem>>, vector<16x128xf32>,
    return
  }
  func.func @transform_0(%arg0: i32, %arg1: i32) -> (i32, i32) {
    %c0_i32 = arith.constant 0 : i32
    %c0_i32_0 = arith.constant 0 : i32
    return %arg0, %c0_i32 : i32, i32
  }
  func.func @transform_1(%arg0: i32, %arg1: i32) -> (i32, i32) {
    %c0_i32 = arith.constant 0 : i32
    %c0_i32_0 = arith.constant 0 : i32
    %c0_i32_1 = arith.constant 0 : i32
    return %c0_i32, %c0_i32_0 : i32, i32
  }
  func.func @transform_2(%arg0: i32, %arg1: i32) -> (i32, i32) {
    %c0_i32 = arith.constant 0 : i32
    %c0_i32_0 = arith.constant 0 : i32
    %c0_i32_1 = arith.constant 0 : i32
    return %c0_i32, %c0_i32_0 : i32, i32
  }
  func.func @transform_3(%arg0: i32, %arg1: i32) -> (i32, i32) {
    %c0_i32 = arith.constant 0 : i32
    %c0_i32_0 = arith.constant 0 : i32
    return %c0_i32, %arg1 : i32, i32
  }
  func.func @transform_4(%arg0: i32, %arg1: i32) -> (i32, i32) {
    %c0_i32 = arith.constant 0 : i32
    %c0_i32_0 = arith.constant 0 : i32
    return %c0_i32, %arg1 : i32, i32
  }
  func.func @transform_5(%arg0: i32, %arg1: i32) -> (i32, i32) {
    %c0_i32 = arith.constant 0 : i32
    return %arg0, %arg1 : i32, i32
  }
}

module attributes {stable_mosaic.version = 11 : i64} {
  func.func @prenorm_kernel(%arg0: i32, %arg1: i32, %arg2: memref<16x128xf32, #tpu.memory_space<vmem>>, %arg3: memref<1x128xf32, #tpu.memory_space<vmem>>, %arg4: memref<1x128xf32, #tpu.memory_space<vmem>>, %arg5: memref<128x128xf32, #tpu.memory_space<vmem>>, %arg6: memref<1x128xf32, #tpu.memory_space<vmem>>, %arg7: memref<16x128xf32, #tpu.memory_space<vmem>>, %arg8: memref<16x128xf32, #tpu.memory_space<vmem>>) attributes {dimension_semantics = [#tpu.dimension_semantics<parallel>, #tpu.dimension_semantics<arbitrary>], iteration_bounds = array<i64: 1, 1>, scalar_prefetch = 0 : i64, scratch_operands = 1 : i64, tpu.core_type = #tpu.core_type<tc>, window_params = [{transform_indices = @transform_0, window_bounds = array<i64: 16, 128>}, {pipeline_mode = #tpu.pipeline_mode<synchronous>, transform_indices = @transform_1, window_bounds = array<i64: 1, 128>}, {pipeline_mode = #tpu.pipeline_mode<synchronous>, transform_indices = @transform_2, window_bounds = array<i64: 1, 128>}, {transform_indices = @transform_3, window_bounds = array<i64: 128, 128>}, {transform_indices = @transform_4, window_bounds = array<i64: 1, 128>}, {transform_indices = @transform_5, window_bounds = array<i64: 16, 128>}]} {
    %c0_i32 = arith.constant 0 : i32
    %0 = arith.cmpi eq, %arg1, %c0_i32 : i32
    %1 = arith.extui %0 : i1 to i32
    %c0_i32_0 = arith.constant 0 : i32
    %2 = arith.cmpi ne, %1, %c0_i32_0 : i32
    scf.if %2 {
      %c0_8 = arith.constant 0 : index
      %c0_9 = arith.constant 0 : index
      %10 = vector.load %arg2[%c0_8, %c0_9] : memref<16x128xf32, #tpu.memory_space<vmem>>, vector<16x128xf32>
      %cst_10 = arith.constant dense<0.000000e+00> : vector<16xf32>
      %11 = vector.multi_reduction <add>, %10, %cst_10 [1] : vector<16x128xf32> to vector<16xf32>
      %12 = vector.shape_cast %11 : vector<16xf32> to vector<16x1xf32>
      %cst_11 = arith.constant 1.280000e+02 : f32
      %13 = vector.broadcast %cst_11 : f32 to vector<16x1xf32>
      %14 = arith.divf %12, %13 : vector<16x1xf32>
      %15 = vector.broadcast %14 : vector<16x1xf32> to vector<16x128xf32>
      %16 = arith.subf %10, %15 : vector<16x128xf32>
      %17 = arith.mulf %16, %16 : vector<16x128xf32>
      %cst_12 = arith.constant dense<0.000000e+00> : vector<16xf32>
      %18 = vector.multi_reduction <add>, %17, %cst_12 [1] : vector<16x128xf32> to vector<16xf32>
      %19 = vector.shape_cast %18 : vector<16xf32> to vector<16x1xf32>
      %cst_13 = arith.constant 1.280000e+02 : f32
      %20 = vector.broadcast %cst_13 : f32 to vector<16x1xf32>
      %21 = arith.divf %19, %20 : vector<16x1xf32>
      %cst_14 = arith.constant 9.99999974E-6 : f32
      %22 = vector.broadcast %cst_14 : f32 to vector<16x1xf32>
      %23 = arith.addf %21, %22 : vector<16x1xf32>
      %24 = math.rsqrt %23 : vector<16x1xf32>
      %c0_15 = arith.constant 0 : index
      %c0_16 = arith.constant 0 : index
      %25 = vector.load %arg3[%c0_15, %c0_16] : memref<1x128xf32, #tpu.memory_space<vmem>>, vector<1x128xf32>
      %26 = vector.broadcast %24 : vector<16x1xf32> to vector<16x128xf32>
      %27 = vector.broadcast %25 : vector<1x128xf32> to vector<16x128xf32>
      %28 = arith.mulf %26, %27 : vector<16x128xf32>
      %29 = arith.mulf %16, %28 : vector<16x128xf32>
      %c0_17 = arith.constant 0 : index
      %c0_18 = arith.constant 0 : index
      %30 = vector.load %arg4[%c0_17, %c0_18] : memref<1x128xf32, #tpu.memory_space<vmem>>, vector<1x128xf32>
      %31 = vector.broadcast %30 : vector<1x128xf32> to vector<16x128xf32>
      %32 = arith.addf %29, %31 : vector<16x128xf32>
      %c0_19 = arith.constant 0 : index
      %c0_20 = arith.constant 0 : index
      %33 = vector.load %arg8[%c0_19, %c0_20] : memref<16x128xf32, #tpu.memory_space<vmem>>, vector<16x128xf32>
      tpu.vector_store %arg8[%c0_19, %c0_20], %32 {strides = array<i32>} : memref<16x128xf32, #tpu.memory_space<vmem>>, vector<16x128xf32>,
    } else {
    }
    %c0 = arith.constant 0 : index
    %c0_1 = arith.constant 0 : index
    %3 = vector.load %arg8[%c0, %c0_1] : memref<16x128xf32, #tpu.memory_space<vmem>>, vector<16x128xf32>
    %c0_2 = arith.constant 0 : index
    %c0_3 = arith.constant 0 : index
    %4 = vector.load %arg5[%c0_2, %c0_3] : memref<128x128xf32, #tpu.memory_space<vmem>>, vector<128x128xf32>
    %cst = arith.constant dense<0.000000e+00> : vector<16x128xf32>
    %5 = tpu.matmul %3, %4, %cst {dimension_numbers = #tpu.dot_dimension_numbers<[1], [0], [0], [1], [0, 0, 1, 1], [], []>} : vector<16x128xf32>, vector<128x128xf32>, vector<16x128xf32> -> vector<16x128xf32>
    %c0_4 = arith.constant 0 : index
    %c0_5 = arith.constant 0 : index
    %6 = vector.load %arg6[%c0_4, %c0_5] : memref<1x128xf32, #tpu.memory_space<vmem>>, vector<1x128xf32>
    %7 = vector.broadcast %6 : vector<1x128xf32> to vector<16x128xf32>
    %8 = arith.addf %5, %7 : vector<16x128xf32>
    %c0_6 = arith.constant 0 : index
    %c0_7 = arith.constant 0 : index
    %9 = vector.load %arg7[%c0_6, %c0_7] : memref<16x128xf32, #tpu.memory_space<vmem>>, vector<16x128xf32>
    tpu.vector_store %arg7[%c0_6, %c0_7], %8 {strides = array<i32>} : memref<16x128xf32, #tpu.memory_space<vmem>>, vector<16x128xf32>,
    return
  }
  func.func @transform_0(%arg0: i32, %arg1: i32) -> (i32, i32) {
    %c0_i32 = arith.constant 0 : i32
    %c0_i32_0 = arith.constant 0 : i32
    return %arg0, %c0_i32 : i32, i32
  }
  func.func @transform_1(%arg0: i32, %arg1: i32) -> (i32, i32) {
    %c0_i32 = arith.constant 0 : i32
    %c0_i32_0 = arith.constant 0 : i32
    %c0_i32_1 = arith.constant 0 : i32
    return %c0_i32, %c0_i32_0 : i32, i32
  }
  func.func @transform_2(%arg0: i32, %arg1: i32) -> (i32, i32) {
    %c0_i32 = arith.constant 0 : i32
    %c0_i32_0 = arith.constant 0 : i32
    %c0_i32_1 = arith.constant 0 : i32
    return %c0_i32, %c0_i32_0 : i32, i32
  }
  func.func @transform_3(%arg0: i32, %arg1: i32) -> (i32, i32) {
    %c0_i32 = arith.constant 0 : i32
    %c0_i32_0 = arith.constant 0 : i32
    return %c0_i32, %arg1 : i32, i32
  }
  func.func @transform_4(%arg0: i32, %arg1: i32) -> (i32, i32) {
    %c0_i32 = arith.constant 0 : i32
    %c0_i32_0 = arith.constant 0 : i32
    return %c0_i32, %arg1 : i32, i32
  }
  func.func @transform_5(%arg0: i32, %arg1: i32) -> (i32, i32) {
    %c0_i32 = arith.constant 0 : i32
    return %arg0, %arg1 : i32, i32
  }
}

</mosaic_0001>

<llo_original>
// kernel: tpu_custom_call.1
$region0: #{tpu_custom_call.1}
  #allocation0 [shape = 'u32[]', space=smem, size = 0x4, offset = 0x4, fixed_abs, tag = 'smem constant byte address 0x4 - core index']
  #allocation1 [shape = 'u32[144,128]{1,0:T(1,128)}', space=vmem, size = 0x12000, scoped, tag = 'internal scratch']
  #allocation2 [shape = 'f32[16,128]{1,0:T(8,128)}', space=vmem, size = 0x2000, scoped, tag = 'scratch operand']
  %s0 = inlined_call_operand.hbm [shape: f32[16,128], index: 0, kind: input, shape index: {}]
  %s1 = inlined_call_operand.vmem [shape: f32[1,128], index: 1, kind: input, shape index: {}]
  %s2 = inlined_call_operand.vmem [shape: f32[1,128], index: 2, kind: input, shape index: {}]
  %s3 = inlined_call_operand.hbm [shape: f32[128,128], index: 3, kind: input, shape index: {}]
  %s4 = inlined_call_operand.vmem [shape: f32[1,128], index: 4, kind: input, shape index: {}]
  %s5 = inlined_call_operand.hbm [shape: f32[16,128], index: 5, kind: output, shape index: {}]
  %s6 = sld [smem:[#allocation0]]
  $region42: #{tpu_custom_call.1} parent=0
    _
  %s8 = ssub.s32 1, %s6
  %s9 = scalar_select 0, %s8, %s6
  $region1: #{tpu_custom_call.1} parent=0
    #allocation3 [shape = 'u8[8192]{0}', space=vmem, size = 0x2000, scoped, tag = 'input window, operand 0, single buffered']
    #allocation4 [shape = 's32[1]{0}', space=sflag, size = 0x4, scoped, tag = 'scoped memory for tpu_custom_call.1']
    #allocation5 [shape = 's32[1]{0}', space=sflag, size = 0x4, scoped, tag = 'scoped memory for tpu_custom_call.1']
    #allocation6 [shape = 'u8[65536]{0}', space=vmem, size = 0x10000, scoped, tag = 'input window, operand 3, single buffered']
    #allocation7 [shape = 's32[1]{0}', space=sflag, size = 0x4, scoped, tag = 'scoped memory for tpu_custom_call.1']
    #allocation8 [shape = 'u8[8192]{0}', space=vmem, size = 0x2000, scoped, tag = 'output window, operand 0, single buffered']
    %10 = vsyncpa [#allocation4], 0
    %11 = vsyncpa [#allocation7], 0
    %12 = vsyncpa [#allocation5], 0
    // Predicated region
    $region2: #{tpu_custom_call.1} parent=1 // pred_check
      _
    $region3: #{tpu_custom_call.1} parent=1 // pred_check_branch
      %14 = sbr.rel (0) target = $region5
    $region4: #{tpu_custom_call.1} parent=1 // pred_region
      %s16 = ssub.s32 256, 256
      %17 = vsyncadd [#allocation4], %s16
      %s18 = sshll.u32 [#allocation3], 4
      %s19 = int_to_ptr.vmem [resolvable:$true] %s18
      %24 = dma.hbm_to_vmem [thread:$0]  %s0, 256, %s19, [#allocation4], 128, 128, 8
    $region5: #{tpu_custom_call.1} parent=1 // pred_fallthru
      _
    // Predicated region
    $region6: #{tpu_custom_call.1} parent=1 // pred_check
      _
    $region7: #{tpu_custom_call.1} parent=1 // pred_check_branch
      %26 = sbr.rel (0) target = $region9
    $region8: #{tpu_custom_call.1} parent=1 // pred_region
      _
    $region9: #{tpu_custom_call.1} parent=1 // pred_fallthru
      _
    // Predicated region
    $region10: #{tpu_custom_call.1} parent=1 // pred_check
      _
    $region11: #{tpu_custom_call.1} parent=1 // pred_check_branch
      %28 = sbr.rel (0) target = $region13
    $region12: #{tpu_custom_call.1} parent=1 // pred_region
      _
    $region13: #{tpu_custom_call.1} parent=1 // pred_fallthru
      _
    // Predicated region
    $region14: #{tpu_custom_call.1} parent=1 // pred_check
      _
    $region15: #{tpu_custom_call.1} parent=1 // pred_check_branch
      %30 = sbr.rel (0) target = $region17
    $region16: #{tpu_custom_call.1} parent=1 // pred_region
      %s32 = ssub.s32 2048, 2048
      %33 = vsyncadd [#allocation7], %s32
      %s34 = sshll.u32 [#allocation6], 4
      %s35 = int_to_ptr.vmem [resolvable:$true] %s34
      %40 = dma.hbm_to_vmem [thread:$0]  %s3, 2048, %s35, [#allocation7], 128, 128, 8
    $region17: #{tpu_custom_call.1} parent=1 // pred_fallthru
      _
    // Predicated region
    $region18: #{tpu_custom_call.1} parent=1 // pred_check
      _
    $region19: #{tpu_custom_call.1} parent=1 // pred_check_branch
      %42 = sbr.rel (0) target = $region21
    $region20: #{tpu_custom_call.1} parent=1 // pred_region
      _
    $region21: #{tpu_custom_call.1} parent=1 // pred_fallthru
      _
    // Predicated region
    $region22: #{tpu_custom_call.1} parent=1 // pred_check
      _
    $region23: #{tpu_custom_call.1} parent=1 // pred_check_branch
      %44 = sbr.rel (0) target = $region25
    $region24: #{tpu_custom_call.1} parent=1 // pred_region
      %45 = dma.done [#allocation4], 256
    $region25: #{tpu_custom_call.1} parent=1 // pred_fallthru
      _
    // Predicated region
    $region26: #{tpu_custom_call.1} parent=1 // pred_check
      _
    $region27: #{tpu_custom_call.1} parent=1 // pred_check_branch
      %47 = sbr.rel (0) target = $region29
    $region28: #{tpu_custom_call.1} parent=1 // pred_region
      %48 = dma.done [#allocation7], 2048
    $region29: #{tpu_custom_call.1} parent=1 // pred_fallthru
      _
    %p49 = scmp.eq.s32.totalorder 0, 0
    // Predicated region
    $region30: #{tpu_custom_call.1} parent=1 // pred_check
      %p50 = pneg %p49
    $region31: #{tpu_custom_call.1} parent=1 // pred_check_branch
      %52 = sbr.rel (%p50) target = $region33
    $region32: #{tpu_custom_call.1} parent=1 // pred_region
      %v53 = vld [vmem:[#allocation3] sm:$0xff]
      %v54 = vld [vmem:[#allocation3 + $0x8] sm:$0xff]
      %55 = vadd.xlane.f32.xlu0 %v53
      %v56 = vpop.xlane.xlu0 %55
      %57 = vadd.xlane.f32.xlu0 %v54
      %v58 = vpop.xlane.xlu0 %57
      %v59 = vrcp.pop 128.0
      %v60 = vmul.f32 %v56, %v59
      %v61 = vmul.f32 %v58, %v59
      %v62 = vsub.f32 %v53, %v60
      %v63 = vsub.f32 %v54, %v61
      %v64 = vmul.f32 %v62, %v62
      %v65 = vmul.f32 %v63, %v63
      %66 = vadd.xlane.f32.xlu0 %v64
      %v67 = vpop.xlane.xlu0 %66
      %68 = vadd.xlane.f32.xlu0 %v65
      %v69 = vpop.xlane.xlu0 %68
      %v70 = vmul.f32 %v67, %v59
      %v71 = vmul.f32 %v69, %v59
      %v72 = vadd.f32 %v70, 1e-05
      %v73 = vadd.f32 %v71, 1e-05
      %v74 = vrsqrt.pop %v72
      %v75 = vrsqrt.pop %v73
      %v76 = vld [vmem:[%s1] sm:$0x1]
      %v78 = vlaneseq
      %v79 = vshrl.u32 %v78, 7
      %v80 = vsub.s32 0, %v79
      %v81 = vrot.slane %v76, %v80
      %v83 = vmul.f32 %v74, %v81
      %v84 = vmul.f32 %v75, %v81
      %v85 = vmul.f32 %v62, %v83
      %v86 = vmul.f32 %v63, %v84
      %v87 = vld [vmem:[%s2] sm:$0x1]
      %v89 = vlaneseq
      %v90 = vshrl.u32 %v89, 7
      %v91 = vsub.s32 0, %v90
      %v92 = vrot.slane %v87, %v91
      %v94 = vadd.f32 %v85, %v92
      %v95 = vadd.f32 %v86, %v92
      %96 = vst [vmem:[#allocation2] sm:$0xff] %v94
      %97 = vst [vmem:[#allocation2 + $0x8] sm:$0xff] %v95
    $region33: #{tpu_custom_call.1} parent=1 // pred_fallthru
      _
    %v98 = vld [vmem:[#allocation2] sm:$0xff]
    %v99 = vld [vmem:[#allocation2 + $0x8] sm:$0xff]
    %v100 = vld [vmem:[#allocation6] sm:$0xff]
    %v101 = vld [vmem:[#allocation6 + $0x8] sm:$0xff]
    %v102 = vld [vmem:[#allocation6 + $0x10] sm:$0xff]
    %v103 = vld [vmem:[#allocation6 + $0x18] sm:$0xff]
    %v104 = vld [vmem:[#allocation6 + $0x20] sm:$0xff]
    %v105 = vld [vmem:[#allocation6 + $0x28] sm:$0xff]
    %v106 = vld [vmem:[#allocation6 + $0x30] sm:$0xff]
    %v107 = vld [vmem:[#allocation6 + $0x38] sm:$0xff]
    %v108 = vld [vmem:[#allocation6 + $0x40] sm:$0xff]
    %v109 = vld [vmem:[#allocation6 + $0x48] sm:$0xff]
    %v110 = vld [vmem:[#allocation6 + $0x50] sm:$0xff]
    %v111 = vld [vmem:[#allocation6 + $0x58] sm:$0xff]
    %v112 = vld [vmem:[#allocation6 + $0x60] sm:$0xff]
    %v113 = vld [vmem:[#allocation6 + $0x68] sm:$0xff]
    %v114 = vld [vmem:[#allocation6 + $0x70] sm:$0xff]
    %v115 = vld [vmem:[#allocation6 + $0x78] sm:$0xff]
    %v116 = vld [vmem:[%s4] sm:$0x1]
    %v118 = vlaneseq
    %v119 = vshrl.u32 %v118, 7
    %v120 = vsub.s32 0, %v119
    %v121 = vrot.slane %v116, %v120
    %123 = vmatprep.subr.mxu0 0.0
    %124 = vmatpush1.msra.mxu0 %v100
    %125 = vmatprep.subr.mxu0 0.0
    %126 = vmatpush1.msra.mxu0 %v101
    %127 = vmatprep.subr.mxu0 0.0
    %128 = vmatpush1.msra.mxu0 %v102
    %129 = vmatprep.subr.mxu0 0.0
    %130 = vmatpush1.msra.mxu0 %v103
    %131 = vmatprep.subr.mxu0 0.0
    %132 = vmatpush1.msra.mxu0 %v104
    %133 = vmatprep.subr.mxu0 0.0
    %134 = vmatpush1.msra.mxu0 %v105
    %135 = vmatprep.subr.mxu0 0.0
    %136 = vmatpush1.msra.mxu0 %v106
    %137 = vmatprep.subr.mxu0 0.0
    %138 = vmatpush1.msra.mxu0 %v107
    %139 = vmatprep.subr.mxu0 0.0
    %140 = vmatpush1.msra.mxu0 %v108
    %141 = vmatprep.subr.mxu0 0.0
    %142 = vmatpush1.msra.mxu0 %v109
    %143 = vmatprep.subr.mxu0 0.0
    %144 = vmatpush1.msra.mxu0 %v110
    %145 = vmatprep.subr.mxu0 0.0
    %146 = vmatpush1.msra.mxu0 %v111
    %147 = vmatprep.subr.mxu0 0.0
    %148 = vmatpush1.msra.mxu0 %v112
    %149 = vmatprep.subr.mxu0 0.0
    %150 = vmatpush1.msra.mxu0 %v113
    %151 = vmatprep.subr.mxu0 0.0
    %152 = vmatpush1.msra.mxu0 %v114
    %153 = vmatprep.subr.mxu0 0.0
    %154 = vmatpush1.msra.mxu0 %v115
    %155 = vmatprep.subr.mxu0 0.0
    %156 = vmatpush1.msra.mxu0 0.0
    %157 = vmatprep.subr.mxu0 0.0
    %158 = vmatpush1.msra.mxu0 0.0
    %159 = vmatprep.subr.mxu0 0.0
    %160 = vmatpush1.msra.mxu0 0.0
    %161 = vmatprep.subr.mxu0 0.0
    %162 = vmatpush1.msra.mxu0 0.0
    %163 = vmatprep.subr.mxu0 0.0
    %164 = vmatpush1.msra.mxu0 0.0
    %165 = vmatprep.subr.mxu0 0.0
    %166 = vmatpush1.msra.mxu0 0.0
    %167 = vmatprep.subr.mxu0 0.0
    %168 = vmatpush1.msra.mxu0 0.0
    %169 = vmatprep.subr.mxu0 0.0
    %170 = vmatpush1.msra.mxu0 0.0
    %171 = vmatprep.subr.mxu0 0.0
    %172 = vmatpush1.msra.mxu0 0.0
    %173 = vmatprep.subr.mxu0 0.0
    %174 = vmatpush1.msra.mxu0 0.0
    %175 = vmatprep.subr.mxu0 0.0
    %176 = vmatpush1.msra.mxu0 0.0
    %177 = vmatprep.subr.mxu0 0.0
    %178 = vmatpush1.msra.mxu0 0.0
    %179 = vmatprep.subr.mxu0 0.0
    %180 = vmatpush1.msra.mxu0 0.0
    %181 = vmatprep.subr.mxu0 0.0
    %182 = vmatpush1.msra.mxu0 0.0
    %183 = vmatprep.subr.mxu0 0.0
    %184 = vmatpush1.msra.mxu0 0.0
    %185 = vmatprep.subr.mxu0 0.0
    %186 = vmatpush1.msra.mxu0 0.0
    %187 = vmatprep.mubr.f32.mxu0 0.0
    %188 = vmatmul.mubr.f32.gmra.mrb[0].mxu0 %v98
    %v189 = vpop.f32.mrb[0].mxu0
    %v190 = vadd.f32 %v121, %v189
    %v191 = vpop.f32.mrb[0].mxu0
    %192 = vmatprep.mubr.f32.mxu0 0.0
    %193 = vmatmul.mubr.f32.gmra.mrb[0].mxu0 %v99
    %v194 = vpop.f32.mrb[0].mxu0
    %v195 = vadd.f32 %v121, %v194
    %v196 = vpop.f32.mrb[0].mxu0
    %197 = vdwg.mxu0
    %198 = vst [vmem:[#allocation8] sm:$0xff] %v190
    %199 = vst [vmem:[#allocation8 + $0x8] sm:$0xff] %v195
    // Predicated region
    $region34: #{tpu_custom_call.1} parent=1 // pred_check
      _
    $region35: #{tpu_custom_call.1} parent=1 // pred_check_branch
      %201 = sbr.rel (0) target = $region37
    $region36: #{tpu_custom_call.1} parent=1 // pred_region
      %s203 = ssub.s32 256, 256
      %204 = vsyncadd [#allocation5], %s203
      %s205 = sshll.u32 [#allocation8], 4
      %s206 = int_to_ptr.vmem [resolvable:$true] %s205
      %211 = dma.vmem_to_hbm [thread:$0]  %s206, 256, %s5, [#allocation5], 128, 128, 8
    $region37: #{tpu_custom_call.1} parent=1 // pred_fallthru
      _
    // Predicated region
    $region38: #{tpu_custom_call.1} parent=1 // pred_check
      _
    $region39: #{tpu_custom_call.1} parent=1 // pred_check_branch
      %213 = sbr.rel (0) target = $region41
    $region40: #{tpu_custom_call.1} parent=1 // pred_region
      %214 = dma.done [#allocation5], 256
    $region41: #{tpu_custom_call.1} parent=1 // pred_fallthru
      _
    %215 = vsyncpa [#allocation4], 1
    %216 = vsyncpa [#allocation7], 1
    %217 = vsyncpa [#allocation5], 1

// kernel: tpu_custom_call.1
$region0: #{tpu_custom_call.1}
  #allocation0 [shape = 'u32[]', space=smem, size = 0x4, offset = 0x4, fixed_abs, tag = 'smem constant byte address 0x4 - core index']
  #allocation1 [shape = 'u32[144,128]{1,0:T(1,128)}', space=vmem, size = 0x12000, scoped, tag = 'internal scratch']
  #allocation2 [shape = 'f32[16,128]{1,0:T(8,128)}', space=vmem, size = 0x2000, scoped, tag = 'scratch operand']
  %s0 = inlined_call_operand.hbm [shape: f32[16,128], index: 0, kind: input, shape index: {}]
  %s1 = inlined_call_operand.vmem [shape: f32[1,128], index: 1, kind: input, shape index: {}]
  %s2 = inlined_call_operand.vmem [shape: f32[1,128], index: 2, kind: input, shape index: {}]
  %s3 = inlined_call_operand.hbm [shape: f32[128,128], index: 3, kind: input, shape index: {}]
  %s4 = inlined_call_operand.vmem [shape: f32[1,128], index: 4, kind: input, shape index: {}]
  %s5 = inlined_call_operand.hbm [shape: f32[16,128], index: 5, kind: output, shape index: {}]
  %s6 = sld [smem:[#allocation0]]
  $region42: #{tpu_custom_call.1} parent=0
    _
  %s8 = ssub.s32 1, %s6
  %s9 = scalar_select 0, %s8, %s6
  $region1: #{tpu_custom_call.1} parent=0
    #allocation3 [shape = 'u8[8192]{0}', space=vmem, size = 0x2000, scoped, tag = 'input window, operand 0, single buffered']
    #allocation4 [shape = 's32[1]{0}', space=sflag, size = 0x4, scoped, tag = 'scoped memory for tpu_custom_call.1']
    #allocation5 [shape = 's32[1]{0}', space=sflag, size = 0x4, scoped, tag = 'scoped memory for tpu_custom_call.1']
    #allocation6 [shape = 'u8[65536]{0}', space=vmem, size = 0x10000, scoped, tag = 'input window, operand 3, single buffered']
    #allocation7 [shape = 's32[1]{0}', space=sflag, size = 0x4, scoped, tag = 'scoped memory for tpu_custom_call.1']
    #allocation8 [shape = 'u8[8192]{0}', space=vmem, size = 0x2000, scoped, tag = 'output window, operand 0, single buffered']
    %10 = vsyncpa [#allocation4], 0
    %11 = vsyncpa [#allocation7], 0
    %12 = vsyncpa [#allocation5], 0
    // Predicated region
    $region2: #{tpu_custom_call.1} parent=1 // pred_check
      _
    $region3: #{tpu_custom_call.1} parent=1 // pred_check_branch
      %14 = sbr.rel (0) target = $region5
    $region4: #{tpu_custom_call.1} parent=1 // pred_region
      %s16 = ssub.s32 256, 256
      %17 = vsyncadd [#allocation4], %s16
      %s18 = sshll.u32 [#allocation3], 4
      %s19 = int_to_ptr.vmem [resolvable:$true] %s18
      %24 = dma.hbm_to_vmem [thread:$0]  %s0, 256, %s19, [#allocation4], 128, 128, 8
    $region5: #{tpu_custom_call.1} parent=1 // pred_fallthru
      _
    // Predicated region
    $region6: #{tpu_custom_call.1} parent=1 // pred_check
      _
    $region7: #{tpu_custom_call.1} parent=1 // pred_check_branch
      %26 = sbr.rel (0) target = $region9
    $region8: #{tpu_custom_call.1} parent=1 // pred_region
      _
    $region9: #{tpu_custom_call.1} parent=1 // pred_fallthru
      _
    // Predicated region
    $region10: #{tpu_custom_call.1} parent=1 // pred_check
      _
    $region11: #{tpu_custom_call.1} parent=1 // pred_check_branch
      %28 = sbr.rel (0) target = $region13
    $region12: #{tpu_custom_call.1} parent=1 // pred_region
      _
    $region13: #{tpu_custom_call.1} parent=1 // pred_fallthru
      _
    // Predicated region
    $region14: #{tpu_custom_call.1} parent=1 // pred_check
      _
    $region15: #{tpu_custom_call.1} parent=1 // pred_check_branch
      %30 = sbr.rel (0) target = $region17
    $region16: #{tpu_custom_call.1} parent=1 // pred_region
      %s32 = ssub.s32 2048, 2048
      %33 = vsyncadd [#allocation7], %s32
      %s34 = sshll.u32 [#allocation6], 4
      %s35 = int_to_ptr.vmem [resolvable:$true] %s34
      %40 = dma.hbm_to_vmem [thread:$0]  %s3, 2048, %s35, [#allocation7], 128, 128, 8
    $region17: #{tpu_custom_call.1} parent=1 // pred_fallthru
      _
    // Predicated region
    $region18: #{tpu_custom_call.1} parent=1 // pred_check
      _
    $region19: #{tpu_custom_call.1} parent=1 // pred_check_branch
      %42 = sbr.rel (0) target = $region21
    $region20: #{tpu_custom_call.1} parent=1 // pred_region
      _
    $region21: #{tpu_custom_call.1} parent=1 // pred_fallthru
      _
    // Predicated region
    $region22: #{tpu_custom_call.1} parent=1 // pred_check
      _
    $region23: #{tpu_custom_call.1} parent=1 // pred_check_branch
      %44 = sbr.rel (0) target = $region25
    $region24: #{tpu_custom_call.1} parent=1 // pred_region
      %45 = dma.done [#allocation4], 256
    $region25: #{tpu_custom_call.1} parent=1 // pred_fallthru
      _
    // Predicated region
    $region26: #{tpu_custom_call.1} parent=1 // pred_check
      _
    $region27: #{tpu_custom_call.1} parent=1 // pred_check_branch
      %47 = sbr.rel (0) target = $region29
    $region28: #{tpu_custom_call.1} parent=1 // pred_region
      %48 = dma.done [#allocation7], 2048
    $region29: #{tpu_custom_call.1} parent=1 // pred_fallthru
      _
    %p49 = scmp.eq.s32.totalorder 0, 0
    // Predicated region
    $region30: #{tpu_custom_call.1} parent=1 // pred_check
      %p50 = pneg %p49
    $region31: #{tpu_custom_call.1} parent=1 // pred_check_branch
      %52 = sbr.rel (%p50) target = $region33
    $region32: #{tpu_custom_call.1} parent=1 // pred_region
      %v53 = vld [vmem:[#allocation3] sm:$0xff]
      %v54 = vld [vmem:[#allocation3 + $0x8] sm:$0xff]
      %55 = vadd.xlane.f32.xlu0 %v53
      %v56 = vpop.xlane.xlu0 %55
      %57 = vadd.xlane.f32.xlu0 %v54
      %v58 = vpop.xlane.xlu0 %57
      %v59 = vrcp.pop 128.0
      %v60 = vmul.f32 %v56, %v59
      %v61 = vmul.f32 %v58, %v59
      %v62 = vsub.f32 %v53, %v60
      %v63 = vsub.f32 %v54, %v61
      %v64 = vmul.f32 %v62, %v62
      %v65 = vmul.f32 %v63, %v63
      %66 = vadd.xlane.f32.xlu0 %v64
      %v67 = vpop.xlane.xlu0 %66
      %68 = vadd.xlane.f32.xlu0 %v65
      %v69 = vpop.xlane.xlu0 %68
      %v70 = vmul.f32 %v67, %v59
      %v71 = vmul.f32 %v69, %v59
      %v72 = vadd.f32 %v70, 1e-05
      %v73 = vadd.f32 %v71, 1e-05
      %v74 = vrsqrt.pop %v72
      %v75 = vrsqrt.pop %v73
      %v76 = vld [vmem:[%s1] sm:$0x1]
      %v78 = vlaneseq
      %v79 = vshrl.u32 %v78, 7
      %v80 = vsub.s32 0, %v79
      %v81 = vrot.slane %v76, %v80
      %v83 = vmul.f32 %v74, %v81
      %v84 = vmul.f32 %v75, %v81
      %v85 = vmul.f32 %v62, %v83
      %v86 = vmul.f32 %v63, %v84
      %v87 = vld [vmem:[%s2] sm:$0x1]
      %v89 = vlaneseq
      %v90 = vshrl.u32 %v89, 7
      %v91 = vsub.s32 0, %v90
      %v92 = vrot.slane %v87, %v91
      %v94 = vadd.f32 %v85, %v92
      %v95 = vadd.f32 %v86, %v92
      %96 = vst [vmem:[#allocation2] sm:$0xff] %v94
      %97 = vst [vmem:[#allocation2 + $0x8] sm:$0xff] %v95
    $region33: #{tpu_custom_call.1} parent=1 // pred_fallthru
      _
    %v98 = vld [vmem:[#allocation2] sm:$0xff]
    %v99 = vld [vmem:[#allocation2 + $0x8] sm:$0xff]
    %v100 = vld [vmem:[#allocation6] sm:$0xff]
    %v101 = vld [vmem:[#allocation6 + $0x8] sm:$0xff]
    %v102 = vld [vmem:[#allocation6 + $0x10] sm:$0xff]
    %v103 = vld [vmem:[#allocation6 + $0x18] sm:$0xff]
    %v104 = vld [vmem:[#allocation6 + $0x20] sm:$0xff]
    %v105 = vld [vmem:[#allocation6 + $0x28] sm:$0xff]
    %v106 = vld [vmem:[#allocation6 + $0x30] sm:$0xff]
    %v107 = vld [vmem:[#allocation6 + $0x38] sm:$0xff]
    %v108 = vld [vmem:[#allocation6 + $0x40] sm:$0xff]
    %v109 = vld [vmem:[#allocation6 + $0x48] sm:$0xff]
    %v110 = vld [vmem:[#allocation6 + $0x50] sm:$0xff]
    %v111 = vld [vmem:[#allocation6 + $0x58] sm:$0xff]
    %v112 = vld [vmem:[#allocation6 + $0x60] sm:$0xff]
    %v113 = vld [vmem:[#allocation6 + $0x68] sm:$0xff]
    %v114 = vld [vmem:[#allocation6 + $0x70] sm:$0xff]
    %v115 = vld [vmem:[#allocation6 + $0x78] sm:$0xff]
    %v116 = vld [vmem:[%s4] sm:$0x1]
    %v118 = vlaneseq
    %v119 = vshrl.u32 %v118, 7
    %v120 = vsub.s32 0, %v119
    %v121 = vrot.slane %v116, %v120
    %123 = vmatprep.subr.mxu0 0.0
    %124 = vmatpush1.msra.mxu0 %v100
    %125 = vmatprep.subr.mxu0 0.0
    %126 = vmatpush1.msra.mxu0 %v101
    %127 = vmatprep.subr.mxu0 0.0
    %128 = vmatpush1.msra.mxu0 %v102
    %129 = vmatprep.subr.mxu0 0.0
    %130 = vmatpush1.msra.mxu0 %v103
    %131 = vmatprep.subr.mxu0 0.0
    %132 = vmatpush1.msra.mxu0 %v104
    %133 = vmatprep.subr.mxu0 0.0
    %134 = vmatpush1.msra.mxu0 %v105
    %135 = vmatprep.subr.mxu0 0.0
    %136 = vmatpush1.msra.mxu0 %v106
    %137 = vmatprep.subr.mxu0 0.0
    %138 = vmatpush1.msra.mxu0 %v107
    %139 = vmatprep.subr.mxu0 0.0
    %140 = vmatpush1.msra.mxu0 %v108
    %141 = vmatprep.subr.mxu0 0.0
    %142 = vmatpush1.msra.mxu0 %v109
    %143 = vmatprep.subr.mxu0 0.0
    %144 = vmatpush1.msra.mxu0 %v110
    %145 = vmatprep.subr.mxu0 0.0
    %146 = vmatpush1.msra.mxu0 %v111
    %147 = vmatprep.subr.mxu0 0.0
    %148 = vmatpush1.msra.mxu0 %v112
    %149 = vmatprep.subr.mxu0 0.0
    %150 = vmatpush1.msra.mxu0 %v113
    %151 = vmatprep.subr.mxu0 0.0
    %152 = vmatpush1.msra.mxu0 %v114
    %153 = vmatprep.subr.mxu0 0.0
    %154 = vmatpush1.msra.mxu0 %v115
    %155 = vmatprep.subr.mxu0 0.0
    %156 = vmatpush1.msra.mxu0 0.0
    %157 = vmatprep.subr.mxu0 0.0
    %158 = vmatpush1.msra.mxu0 0.0
    %159 = vmatprep.subr.mxu0 0.0
    %160 = vmatpush1.msra.mxu0 0.0
    %161 = vmatprep.subr.mxu0 0.0
    %162 = vmatpush1.msra.mxu0 0.0
    %163 = vmatprep.subr.mxu0 0.0
    %164 = vmatpush1.msra.mxu0 0.0
    %165 = vmatprep.subr.mxu0 0.0
    %166 = vmatpush1.msra.mxu0 0.0
    %167 = vmatprep.subr.mxu0 0.0
    %168 = vmatpush1.msra.mxu0 0.0
    %169 = vmatprep.subr.mxu0 0.0
    %170 = vmatpush1.msra.mxu0 0.0
    %171 = vmatprep.subr.mxu0 0.0
    %172 = vmatpush1.msra.mxu0 0.0
    %173 = vmatprep.subr.mxu0 0.0
    %174 = vmatpush1.msra.mxu0 0.0
    %175 = vmatprep.subr.mxu0 0.0
    %176 = vmatpush1.msra.mxu0 0.0
    %177 = vmatprep.subr.mxu0 0.0
    %178 = vmatpush1.msra.mxu0 0.0
    %179 = vmatprep.subr.mxu0 0.0
    %180 = vmatpush1.msra.mxu0 0.0
    %181 = vmatprep.subr.mxu0 0.0
    %182 = vmatpush1.msra.mxu0 0.0
    %183 = vmatprep.subr.mxu0 0.0
    %184 = vmatpush1.msra.mxu0 0.0
    %185 = vmatprep.subr.mxu0 0.0
    %186 = vmatpush1.msra.mxu0 0.0
    %187 = vmatprep.mubr.f32.mxu0 0.0
    %188 = vmatmul.mubr.f32.gmra.mrb[0].mxu0 %v98
    %v189 = vpop.f32.mrb[0].mxu0
    %v190 = vadd.f32 %v121, %v189
    %v191 = vpop.f32.mrb[0].mxu0
    %192 = vmatprep.mubr.f32.mxu0 0.0
    %193 = vmatmul.mubr.f32.gmra.mrb[0].mxu0 %v99
    %v194 = vpop.f32.mrb[0].mxu0
    %v195 = vadd.f32 %v121, %v194
    %v196 = vpop.f32.mrb[0].mxu0
    %197 = vdwg.mxu0
    %198 = vst [vmem:[#allocation8] sm:$0xff] %v190
    %199 = vst [vmem:[#allocation8 + $0x8] sm:$0xff] %v195
    // Predicated region
    $region34: #{tpu_custom_call.1} parent=1 // pred_check
      _
    $region35: #{tpu_custom_call.1} parent=1 // pred_check_branch
      %201 = sbr.rel (0) target = $region37
    $region36: #{tpu_custom_call.1} parent=1 // pred_region
      %s203 = ssub.s32 256, 256
      %204 = vsyncadd [#allocation5], %s203
      %s205 = sshll.u32 [#allocation8], 4
      %s206 = int_to_ptr.vmem [resolvable:$true] %s205
      %211 = dma.vmem_to_hbm [thread:$0]  %s206, 256, %s5, [#allocation5], 128, 128, 8
    $region37: #{tpu_custom_call.1} parent=1 // pred_fallthru
      _
    // Predicated region
    $region38: #{tpu_custom_call.1} parent=1 // pred_check
      _
    $region39: #{tpu_custom_call.1} parent=1 // pred_check_branch
      %213 = sbr.rel (0) target = $region41
    $region40: #{tpu_custom_call.1} parent=1 // pred_region
      %214 = dma.done [#allocation5], 256
    $region41: #{tpu_custom_call.1} parent=1 // pred_fallthru
      _
    %215 = vsyncpa [#allocation4], 1
    %216 = vsyncpa [#allocation7], 1
    %217 = vsyncpa [#allocation5], 1

</llo_original>
